<compile_context>
chip_gen: v6e
topology: v6e:2x2x1
jax: 0.10.0
libtpu: 0.0.40
codegen_flags: <defaults>
</compile_context>

<pallas_src>
import jax
import jax.numpy as jnp
from jax.experimental import pallas as pl
from jax.experimental.pallas import tpu as pltpu

LANE = 128
SUBLANE = 8


def _pad_up(n, m):
    return ((n + m - 1) // m) * m


def _pad2d(x, rows, cols):
    r, c = x.shape
    return jnp.pad(x, ((0, rows - r), (0, cols - c)))


def dssm_kernel(ids_ref, emb_ref, w1_ref, b1_ref, w2_ref, b2_ref,
                w3_ref, b3_ref, out_ref):
    ids = ids_ref[...]                         # (BT, S) int32
    bt, s = ids.shape
    vp = emb_ref.shape[0]

    # Per-row token-count histogram over the (VMEM-resident) vocab.  Built
    # with an unrolled loop over S so the peak temporary is (BT, Vp) f32,
    # never a (BT, S, Vp) 3-D one-hot.  Compares run on the VPU in f32/int32.
    iota_v = jax.lax.broadcasted_iota(jnp.int32, (bt, vp), 1)
    counts = jnp.zeros((bt, vp), jnp.float32)
    for t in range(s):                         # static unroll, S is small
        counts = counts + (ids[:, t:t + 1] == iota_v).astype(jnp.float32)

    # Counts are exact integers <= S; bf16 represents integers exactly up to
    # 256, so the MXU cast is lossless for S <= 256.  Otherwise stay f32.
    counts_mxu = counts.astype(jnp.bfloat16) if s <= 256 else counts

    # sum of embeddings = counts @ table; padding_idx row is zero, and the
    # torch.mean denominator is the full sequence length S.
    pooled = jnp.dot(counts_mxu, emb_ref[...],
                     preferred_element_type=jnp.float32) * (1.0 / s)

    # fc: Linear -> ReLU -> Dropout (identity: inference/eval semantics)
    h = jnp.dot(pooled.astype(jnp.bfloat16), w1_ref[...],
                preferred_element_type=jnp.float32) + b1_ref[...]
    h = jnp.maximum(h, 0.0)
    h = jnp.dot(h.astype(jnp.bfloat16), w2_ref[...],
                preferred_element_type=jnp.float32) + b2_ref[...]
    h = jnp.maximum(h, 0.0)

    # output Linear
    o = jnp.dot(h.astype(jnp.bfloat16), w3_ref[...],
                preferred_element_type=jnp.float32) + b3_ref[...]

    # F.normalize(p=2, dim=1); zero-padded lanes contribute 0 to the norm.
    # rsqrt(max(ssq, 1e-24)) == 1 / max(norm, 1e-12) (PyTorch eps).
    ssq = jnp.sum(o * o, axis=1, keepdims=True)
    inv_norm = jax.lax.rsqrt(jnp.maximum(ssq, 1e-24))
    out_ref[...] = o * inv_norm


def dssm_forward(text, emb_table, w1, b1, w2, b2, w3, b3, *, block_b=128):
    B, S = text.shape
    V, E = emb_table.shape
    H1 = w1.shape[1]
    H2 = w2.shape[1]
    OUT = w3.shape[1]

    # Lane-dense zero padding of all feature dims; vocab padded to 128 so the
    # counts/iota/matmul K dimension is tile-aligned.
    Ep, H1p, H2p, OUTp = (_pad_up(d, LANE) for d in (E, H1, H2, OUT))
    Vp = _pad_up(V, LANE)

    # Large, sublane-aligned batch tile (full MXU rows), but never bigger than
    # the padded batch so tiny batches don't get blown up to 128 rows of work.
    block_b = max(SUBLANE, min(_pad_up(block_b, SUBLANE), _pad_up(B, SUBLANE)))
    Bp = _pad_up(B, block_b)
    nb = Bp // block_b

    text_p = jnp.pad(text, ((0, Bp - B), (0, 0)))        # padded rows -> id 0
    emb_p = _pad2d(emb_table, Vp, Ep).astype(jnp.bfloat16)
    emb_p = emb_p.at[0, :].set(0)                        # enforce padding_idx=0
    w1_p = _pad2d(w1, Ep, H1p).astype(jnp.bfloat16)
    w2_p = _pad2d(w2, H1p, H2p).astype(jnp.bfloat16)
    w3_p = _pad2d(w3, H2p, OUTp).astype(jnp.bfloat16)
    b1_p = _pad2d(b1.reshape(1, -1), 1, H1p).astype(jnp.float32)
    b2_p = _pad2d(b2.reshape(1, -1), 1, H2p).astype(jnp.float32)
    b3_p = _pad2d(b3.reshape(1, -1), 1, OUTp).astype(jnp.float32)

    # Advisory cost estimate so XLA can schedule the host-side padding/casts
    # around the kernel instead of serializing.
    flops = 2 * Bp * (Vp * Ep + Ep * H1p + H1p * H2p + H2p * OUTp)
    bytes_accessed = (text_p.size * 4 + emb_p.size * 2
                      + (w1_p.size + w2_p.size + w3_p.size) * 2
                      + (b1_p.size + b2_p.size + b3_p.size) * 4
                      + Bp * OUTp * 4)
    cost = pl.CostEstimate(flops=flops, transcendentals=Bp,
                           bytes_accessed=bytes_accessed)

    grid_spec = pltpu.PrefetchScalarGridSpec(
        num_scalar_prefetch=0,
        grid=(nb,),                                      # batch tiles only
        in_specs=[
            pl.BlockSpec((block_b, S), lambda i: (i, 0)),       # token ids
            # table / weights / biases: constant block index -> DMA'd once,
            # VMEM-resident across all batch tiles.
            pl.BlockSpec((Vp, Ep), lambda i: (0, 0)),
            pl.BlockSpec((Ep, H1p), lambda i: (0, 0)),
            pl.BlockSpec((1, H1p), lambda i: (0, 0)),
            pl.BlockSpec((H1p, H2p), lambda i: (0, 0)),
            pl.BlockSpec((1, H2p), lambda i: (0, 0)),
            pl.BlockSpec((H2p, OUTp), lambda i: (0, 0)),
            pl.BlockSpec((1, OUTp), lambda i: (0, 0)),
        ],
        out_specs=pl.BlockSpec((block_b, OUTp), lambda i: (i, 0)),
    )

    out_padded = pl.pallas_call(
        dssm_kernel,
        out_shape=jax.ShapeDtypeStruct((Bp, OUTp), jnp.float32),
        grid_spec=grid_spec,
        compiler_params=pltpu.CompilerParams(
            dimension_semantics=("parallel",),
            vmem_limit_bytes=32 * 1024 * 1024),   # < v7x 64 MiB/TC physical
        cost_estimate=cost,
    )(text_p, emb_p, w1_p, b1_p, w2_p, b2_p, w3_p, b3_p)

    return out_padded[:B, :OUT]


if __name__ == "__main__":
    # Small shapes consistent with the module:
    #   vocab_size=512, embedding_dim=32, hidden_dims=[64, 32]
    #   -> output Linear(32, 32)   (the loop variable hidden_dim leaks in PyTorch)
    B, S = 16, 8
    V, E = 512, 32
    H1, H2 = 64, 32

    key = jax.random.PRNGKey(0)
    k_txt, k_emb, k1, k2, k3, kb1, kb2, kb3 = jax.random.split(key, 8)

    # token ids, force some padding (id 0) into the batch
    text = jax.random.randint(k_txt, (B, S), 0, V, dtype=jnp.int32)
    text = text.at[:, -2:].set(0)

    # deterministic parameter init (synthetic weights, not a checkpoint)
    emb_table = 0.1 * jax.random.normal(k_emb, (V, E), dtype=jnp.float32)
    emb_table = emb_table.at[0].set(0.0)     # padding_idx=0 row is zero

    w1 = 0.1 * jax.random.normal(k1, (E, H1), dtype=jnp.float32)
    b1 = 0.1 * jax.random.normal(kb1, (1, H1), dtype=jnp.float32)
    w2 = 0.1 * jax.random.normal(k2, (H1, H2), dtype=jnp.float32)
    b2 = 0.1 * jax.random.normal(kb2, (1, H2), dtype=jnp.float32)
    w3 = 0.1 * jax.random.normal(k3, (H2, H2), dtype=jnp.float32)
    b3 = 0.1 * jax.random.normal(kb3, (1, H2), dtype=jnp.float32)

    out = dssm_forward(text, emb_table, w1, b1, w2, b2, w3, b3, block_b=128)
    out = jax.block_until_ready(out)

    # pure-JAX f32 reference (kernel uses bf16 MXU operands -> looser tolerance)
    pooled_ref = jnp.mean(emb_table[text], axis=1)
    h_ref = jnp.maximum(pooled_ref @ w1 + b1, 0.0)
    h_ref = jnp.maximum(h_ref @ w2 + b2, 0.0)
    o_ref = h_ref @ w3 + b3
    o_ref = o_ref / jnp.maximum(
        jnp.sqrt(jnp.sum(o_ref * o_ref, axis=1, keepdims=True)), 1e-12)

    assert out.shape == o_ref.shape
    assert jnp.allclose(out, o_ref, atol=2e-2), "mismatch vs reference"

    print("KERNEL_OK")
</pallas_src>

<mosaic_0001>
module attributes {stable_mosaic.version = 11 : i64} {
  func.func @dssm_kernel(%arg0: i32, %arg1: memref<16x8xi32, #tpu.memory_space<vmem>>, %arg2: memref<512x128xbf16, #tpu.memory_space<vmem>>, %arg3: memref<128x128xbf16, #tpu.memory_space<vmem>>, %arg4: memref<1x128xf32, #tpu.memory_space<vmem>>, %arg5: memref<128x128xbf16, #tpu.memory_space<vmem>>, %arg6: memref<1x128xf32, #tpu.memory_space<vmem>>, %arg7: memref<128x128xbf16, #tpu.memory_space<vmem>>, %arg8: memref<1x128xf32, #tpu.memory_space<vmem>>, %arg9: memref<16x128xf32, #tpu.memory_space<vmem>>) attributes {dimension_semantics = [#tpu.dimension_semantics<parallel>], iteration_bounds = array<i64: 1>, scalar_prefetch = 0 : i64, scratch_operands = 0 : i64, tpu.core_type = #tpu.core_type<tc>, window_params = [{transform_indices = @transform_0, window_bounds = array<i64: 16, 8>}, {pipeline_mode = #tpu.pipeline_mode<synchronous>, transform_indices = @transform_1, window_bounds = array<i64: 512, 128>}, {pipeline_mode = #tpu.pipeline_mode<synchronous>, transform_indices = @transform_2, window_bounds = array<i64: 128, 128>}, {pipeline_mode = #tpu.pipeline_mode<synchronous>, transform_indices = @transform_3, window_bounds = array<i64: 1, 128>}, {pipeline_mode = #tpu.pipeline_mode<synchronous>, transform_indices = @transform_4, window_bounds = array<i64: 128, 128>}, {pipeline_mode = #tpu.pipeline_mode<synchronous>, transform_indices = @transform_5, window_bounds = array<i64: 1, 128>}, {pipeline_mode = #tpu.pipeline_mode<synchronous>, transform_indices = @transform_6, window_bounds = array<i64: 128, 128>}, {pipeline_mode = #tpu.pipeline_mode<synchronous>, transform_indices = @transform_7, window_bounds = array<i64: 1, 128>}, {transform_indices = @transform_8, window_bounds = array<i64: 16, 128>}]} {
    %c0 = arith.constant 0 : index
    %c0_0 = arith.constant 0 : index
    %0 = vector.load %arg1[%c0, %c0_0] : memref<16x8xi32, #tpu.memory_space<vmem>>, vector<16x8xi32>
    %1 = tpu.iota {dimensions = array<i32: 1>} : vector<16x512xi32>
    %cst = arith.constant 0.000000e+00 : f32
    %2 = vector.broadcast %cst : f32 to vector<16x512xf32>
    %3 = vector.extract_strided_slice %0 {offsets = [0, 0], sizes = [16, 1], strides = [1, 1]} : vector<16x8xi32> to vector<16x1xi32>
    %4 = vector.broadcast %3 : vector<16x1xi32> to vector<16x512xi32>
    %5 = arith.cmpi eq, %4, %1 : vector<16x512xi32>
    %6 = arith.extui %5 : vector<16x512xi1> to vector<16x512xi32>
    %7 = arith.sitofp %6 : vector<16x512xi32> to vector<16x512xf32>
    %8 = arith.addf %2, %7 : vector<16x512xf32>
    %9 = vector.extract_strided_slice %0 {offsets = [0, 1], sizes = [16, 1], strides = [1, 1]} : vector<16x8xi32> to vector<16x1xi32>
    %10 = vector.broadcast %9 : vector<16x1xi32> to vector<16x512xi32>
    %11 = arith.cmpi eq, %10, %1 : vector<16x512xi32>
    %12 = arith.extui %11 : vector<16x512xi1> to vector<16x512xi32>
    %13 = arith.sitofp %12 : vector<16x512xi32> to vector<16x512xf32>
    %14 = arith.addf %8, %13 : vector<16x512xf32>
    %15 = vector.extract_strided_slice %0 {offsets = [0, 2], sizes = [16, 1], strides = [1, 1]} : vector<16x8xi32> to vector<16x1xi32>
    %16 = vector.broadcast %15 : vector<16x1xi32> to vector<16x512xi32>
    %17 = arith.cmpi eq, %16, %1 : vector<16x512xi32>
    %18 = arith.extui %17 : vector<16x512xi1> to vector<16x512xi32>
    %19 = arith.sitofp %18 : vector<16x512xi32> to vector<16x512xf32>
    %20 = arith.addf %14, %19 : vector<16x512xf32>
    %21 = vector.extract_strided_slice %0 {offsets = [0, 3], sizes = [16, 1], strides = [1, 1]} : vector<16x8xi32> to vector<16x1xi32>
    %22 = vector.broadcast %21 : vector<16x1xi32> to vector<16x512xi32>
    %23 = arith.cmpi eq, %22, %1 : vector<16x512xi32>
    %24 = arith.extui %23 : vector<16x512xi1> to vector<16x512xi32>
    %25 = arith.sitofp %24 : vector<16x512xi32> to vector<16x512xf32>
    %26 = arith.addf %20, %25 : vector<16x512xf32>
    %27 = vector.extract_strided_slice %0 {offsets = [0, 4], sizes = [16, 1], strides = [1, 1]} : vector<16x8xi32> to vector<16x1xi32>
    %28 = vector.broadcast %27 : vector<16x1xi32> to vector<16x512xi32>
    %29 = arith.cmpi eq, %28, %1 : vector<16x512xi32>
    %30 = arith.extui %29 : vector<16x512xi1> to vector<16x512xi32>
    %31 = arith.sitofp %30 : vector<16x512xi32> to vector<16x512xf32>
    %32 = arith.addf %26, %31 : vector<16x512xf32>
    %33 = vector.extract_strided_slice %0 {offsets = [0, 5], sizes = [16, 1], strides = [1, 1]} : vector<16x8xi32> to vector<16x1xi32>
    %34 = vector.broadcast %33 : vector<16x1xi32> to vector<16x512xi32>
    %35 = arith.cmpi eq, %34, %1 : vector<16x512xi32>
    %36 = arith.extui %35 : vector<16x512xi1> to vector<16x512xi32>
    %37 = arith.sitofp %36 : vector<16x512xi32> to vector<16x512xf32>
    %38 = arith.addf %32, %37 : vector<16x512xf32>
    %39 = vector.extract_strided_slice %0 {offsets = [0, 6], sizes = [16, 1], strides = [1, 1]} : vector<16x8xi32> to vector<16x1xi32>
    %40 = vector.broadcast %39 : vector<16x1xi32> to vector<16x512xi32>
    %41 = arith.cmpi eq, %40, %1 : vector<16x512xi32>
    %42 = arith.extui %41 : vector<16x512xi1> to vector<16x512xi32>
    %43 = arith.sitofp %42 : vector<16x512xi32> to vector<16x512xf32>
    %44 = arith.addf %38, %43 : vector<16x512xf32>
    %45 = vector.extract_strided_slice %0 {offsets = [0, 7], sizes = [16, 1], strides = [1, 1]} : vector<16x8xi32> to vector<16x1xi32>
    %46 = vector.broadcast %45 : vector<16x1xi32> to vector<16x512xi32>
    %47 = arith.cmpi eq, %46, %1 : vector<16x512xi32>
    %48 = arith.extui %47 : vector<16x512xi1> to vector<16x512xi32>
    %49 = arith.sitofp %48 : vector<16x512xi32> to vector<16x512xf32>
    %50 = arith.addf %44, %49 : vector<16x512xf32>
    %51 = arith.truncf %50 : vector<16x512xf32> to vector<16x512xbf16>
    %c0_1 = arith.constant 0 : index
    %c0_2 = arith.constant 0 : index
    %52 = vector.load %arg2[%c0_1, %c0_2] : memref<512x128xbf16, #tpu.memory_space<vmem>>, vector<512x128xbf16>
    %cst_3 = arith.constant dense<0.000000e+00> : vector<16x128xf32>
    %53 = tpu.matmul %51, %52, %cst_3 {dimension_numbers = #tpu.dot_dimension_numbers<[1], [0], [0], [1], [0, 0, 1, 1], [], []>} : vector<16x512xbf16>, vector<512x128xbf16>, vector<16x128xf32> -> vector<16x128xf32>
    %cst_4 = arith.constant 1.250000e-01 : f32
    %54 = vector.broadcast %cst_4 : f32 to vector<16x128xf32>
    %55 = arith.mulf %53, %54 : vector<16x128xf32>
    %56 = arith.truncf %55 : vector<16x128xf32> to vector<16x128xbf16>
    %c0_5 = arith.constant 0 : index
    %c0_6 = arith.constant 0 : index
    %57 = vector.load %arg3[%c0_5, %c0_6] : memref<128x128xbf16, #tpu.memory_space<vmem>>, vector<128x128xbf16>
    %cst_7 = arith.constant dense<0.000000e+00> : vector<16x128xf32>
    %58 = tpu.matmul %56, %57, %cst_7 {dimension_numbers = #tpu.dot_dimension_numbers<[1], [0], [0], [1], [0, 0, 1, 1], [], []>} : vector<16x128xbf16>, vector<128x128xbf16>, vector<16x128xf32> -> vector<16x128xf32>
    %c0_8 = arith.constant 0 : index
    %c0_9 = arith.constant 0 : index
    %59 = vector.load %arg4[%c0_8, %c0_9] : memref<1x128xf32, #tpu.memory_space<vmem>>, vector<1x128xf32>
    %60 = vector.broadcast %59 : vector<1x128xf32> to vector<16x128xf32>
    %61 = arith.addf %58, %60 : vector<16x128xf32>
    %cst_10 = arith.constant 0.000000e+00 : f32
    %62 = vector.broadcast %cst_10 : f32 to vector<16x128xf32>
    %63 = arith.maximumf %61, %62 : vector<16x128xf32>
    %64 = arith.truncf %63 : vector<16x128xf32> to vector<16x128xbf16>
    %c0_11 = arith.constant 0 : index
    %c0_12 = arith.constant 0 : index
    %65 = vector.load %arg5[%c0_11, %c0_12] : memref<128x128xbf16, #tpu.memory_space<vmem>>, vector<128x128xbf16>
    %cst_13 = arith.constant dense<0.000000e+00> : vector<16x128xf32>
    %66 = tpu.matmul %64, %65, %cst_13 {dimension_numbers = #tpu.dot_dimension_numbers<[1], [0], [0], [1], [0, 0, 1, 1], [], []>} : vector<16x128xbf16>, vector<128x128xbf16>, vector<16x128xf32> -> vector<16x128xf32>
    %c0_14 = arith.constant 0 : index
    %c0_15 = arith.constant 0 : index
    %67 = vector.load %arg6[%c0_14, %c0_15] : memref<1x128xf32, #tpu.memory_space<vmem>>, vector<1x128xf32>
    %68 = vector.broadcast %67 : vector<1x128xf32> to vector<16x128xf32>
    %69 = arith.addf %66, %68 : vector<16x128xf32>
    %cst_16 = arith.constant 0.000000e+00 : f32
    %70 = vector.broadcast %cst_16 : f32 to vector<16x128xf32>
    %71 = arith.maximumf %69, %70 : vector<16x128xf32>
    %72 = arith.truncf %71 : vector<16x128xf32> to vector<16x128xbf16>
    %c0_17 = arith.constant 0 : index
    %c0_18 = arith.constant 0 : index
    %73 = vector.load %arg7[%c0_17, %c0_18] : memref<128x128xbf16, #tpu.memory_space<vmem>>, vector<128x128xbf16>
    %cst_19 = arith.constant dense<0.000000e+00> : vector<16x128xf32>
    %74 = tpu.matmul %72, %73, %cst_19 {dimension_numbers = #tpu.dot_dimension_numbers<[1], [0], [0], [1], [0, 0, 1, 1], [], []>} : vector<16x128xbf16>, vector<128x128xbf16>, vector<16x128xf32> -> vector<16x128xf32>
    %c0_20 = arith.constant 0 : index
    %c0_21 = arith.constant 0 : index
    %75 = vector.load %arg8[%c0_20, %c0_21] : memref<1x128xf32, #tpu.memory_space<vmem>>, vector<1x128xf32>
    %76 = vector.broadcast %75 : vector<1x128xf32> to vector<16x128xf32>
    %77 = arith.addf %74, %76 : vector<16x128xf32>
    %78 = arith.mulf %77, %77 : vector<16x128xf32>
    %cst_22 = arith.constant dense<0.000000e+00> : vector<16xf32>
    %79 = vector.multi_reduction <add>, %78, %cst_22 [1] : vector<16x128xf32> to vector<16xf32>
    %80 = vector.shape_cast %79 : vector<16xf32> to vector<16x1xf32>
    %cst_23 = arith.constant 1.000000e-24 : f32
    %81 = vector.broadcast %cst_23 : f32 to vector<16x1xf32>
    %82 = arith.maximumf %80, %81 : vector<16x1xf32>
    %83 = math.rsqrt %82 : vector<16x1xf32>
    %84 = vector.broadcast %83 : vector<16x1xf32> to vector<16x128xf32>
    %85 = arith.mulf %77, %84 : vector<16x128xf32>
    %c0_24 = arith.constant 0 : index
    %c0_25 = arith.constant 0 : index
    %86 = vector.load %arg9[%c0_24, %c0_25] : memref<16x128xf32, #tpu.memory_space<vmem>>, vector<16x128xf32>
    tpu.vector_store %arg9[%c0_24, %c0_25], %85 {strides = array<i32>} : memref<16x128xf32, #tpu.memory_space<vmem>>, vector<16x128xf32>,
    return
  }
  func.func @transform_0(%arg0: i32) -> (i32, i32) {
    %c0_i32 = arith.constant 0 : i32
    %c0_i32_0 = arith.constant 0 : i32
    return %arg0, %c0_i32 : i32, i32
  }
  func.func @transform_1(%arg0: i32) -> (i32, i32) {
    %c0_i32 = arith.constant 0 : i32
    %c0_i32_0 = arith.constant 0 : i32
    %c0_i32_1 = arith.constant 0 : i32
    return %c0_i32, %c0_i32_0 : i32, i32
  }
  func.func @transform_2(%arg0: i32) -> (i32, i32) {
    %c0_i32 = arith.constant 0 : i32
    %c0_i32_0 = arith.constant 0 : i32
    %c0_i32_1 = arith.constant 0 : i32
    return %c0_i32, %c0_i32_0 : i32, i32
  }
  func.func @transform_3(%arg0: i32) -> (i32, i32) {
    %c0_i32 = arith.constant 0 : i32
    %c0_i32_0 = arith.constant 0 : i32
    %c0_i32_1 = arith.constant 0 : i32
    return %c0_i32, %c0_i32_0 : i32, i32
  }
  func.func @transform_4(%arg0: i32) -> (i32, i32) {
    %c0_i32 = arith.constant 0 : i32
    %c0_i32_0 = arith.constant 0 : i32
    %c0_i32_1 = arith.constant 0 : i32
    return %c0_i32, %c0_i32_0 : i32, i32
  }
  func.func @transform_5(%arg0: i32) -> (i32, i32) {
    %c0_i32 = arith.constant 0 : i32
    %c0_i32_0 = arith.constant 0 : i32
    %c0_i32_1 = arith.constant 0 : i32
    return %c0_i32, %c0_i32_0 : i32, i32
  }
  func.func @transform_6(%arg0: i32) -> (i32, i32) {
    %c0_i32 = arith.constant 0 : i32
    %c0_i32_0 = arith.constant 0 : i32
    %c0_i32_1 = arith.constant 0 : i32
    return %c0_i32, %c0_i32_0 : i32, i32
  }
  func.func @transform_7(%arg0: i32) -> (i32, i32) {
    %c0_i32 = arith.constant 0 : i32
    %c0_i32_0 = arith.constant 0 : i32
    %c0_i32_1 = arith.constant 0 : i32
    return %c0_i32, %c0_i32_0 : i32, i32
  }
  func.func @transform_8(%arg0: i32) -> (i32, i32) {
    %c0_i32 = arith.constant 0 : i32
    %c0_i32_0 = arith.constant 0 : i32
    return %arg0, %c0_i32 : i32, i32
  }
}

</mosaic_0001>

<llo_original>
// kernel: tpu_custom_call.1
$region0: #{tpu_custom_call.1}
  #allocation0 [shape = 'u32[]', space=smem, size = 0x4, offset = 0x4, fixed_abs, tag = 'smem constant byte address 0x4 - core index']
  #allocation1 [shape = 'u32[144,128]{1,0:T(1,128)}', space=vmem, size = 0x12000, scoped, tag = 'internal scratch']
  %s0 = inlined_call_operand.vmem [shape: s32[16,8], index: 0, kind: input, shape index: {}]
  %s1 = inlined_call_operand.hbm [shape: bf16[512,128], index: 1, kind: input, shape index: {}]
  %s2 = inlined_call_operand.hbm [shape: bf16[128,128], index: 2, kind: input, shape index: {}]
  %s3 = inlined_call_operand.vmem [shape: f32[1,128], index: 3, kind: input, shape index: {}]
  %s4 = inlined_call_operand.hbm [shape: bf16[128,128], index: 4, kind: input, shape index: {}]
  %s5 = inlined_call_operand.vmem [shape: f32[1,128], index: 5, kind: input, shape index: {}]
  %s6 = inlined_call_operand.hbm [shape: bf16[128,128], index: 6, kind: input, shape index: {}]
  %s7 = inlined_call_operand.vmem [shape: f32[1,128], index: 7, kind: input, shape index: {}]
  %s8 = inlined_call_operand.hbm [shape: f32[16,128], index: 8, kind: output, shape index: {}]
  %s9 = sld [smem:[#allocation0]]
  $region58: #{tpu_custom_call.1} parent=0
    _
  %s11 = ssub.s32 1, %s9
  %s12 = scalar_select 0, %s11, %s9
  $region1: #{tpu_custom_call.1} parent=0
    #allocation2 [shape = 'u8[131072]{0}', space=vmem, size = 0x20000, scoped, tag = 'input window, operand 1, single buffered']
    #allocation3 [shape = 's32[1]{0}', space=sflag, size = 0x4, scoped, tag = 'scoped memory for tpu_custom_call.1']
    #allocation4 [shape = 's32[1]{0}', space=sflag, size = 0x4, scoped, tag = 'scoped memory for tpu_custom_call.1']
    #allocation5 [shape = 'u8[32768]{0}', space=vmem, size = 0x8000, scoped, tag = 'input window, operand 2, single buffered']
    #allocation6 [shape = 's32[1]{0}', space=sflag, size = 0x4, scoped, tag = 'scoped memory for tpu_custom_call.1']
    #allocation7 [shape = 'u8[32768]{0}', space=vmem, size = 0x8000, scoped, tag = 'input window, operand 4, single buffered']
    #allocation8 [shape = 'u8[32768]{0}', space=vmem, size = 0x8000, scoped, tag = 'input window, operand 6, single buffered']
    #allocation9 [shape = 's32[1]{0}', space=sflag, size = 0x4, scoped, tag = 'scoped memory for tpu_custom_call.1']
    #allocation10 [shape = 'u8[8192]{0}', space=vmem, size = 0x2000, scoped, tag = 'output window, operand 0, single buffered']
    %13 = vsyncpa [#allocation3], 0
    %14 = vsyncpa [#allocation6], 0
    %15 = vsyncpa [#allocation9], 0
    %16 = vsyncpa [#allocation4], 0
    // Predicated region
    $region2: #{tpu_custom_call.1} parent=1 // pred_check
      _
    $region3: #{tpu_custom_call.1} parent=1 // pred_check_branch
      %18 = sbr.rel (0) target = $region5
    $region4: #{tpu_custom_call.1} parent=1 // pred_region
      _
    $region5: #{tpu_custom_call.1} parent=1 // pred_fallthru
      _
    // Predicated region
    $region6: #{tpu_custom_call.1} parent=1 // pred_check
      _
    $region7: #{tpu_custom_call.1} parent=1 // pred_check_branch
      %20 = sbr.rel (0) target = $region9
    $region8: #{tpu_custom_call.1} parent=1 // pred_region
      %s22 = ssub.s32 4096, 4096
      %23 = vsyncadd [#allocation3], %s22
      %s24 = sshll.u32 [#allocation2], 4
      %s25 = int_to_ptr.vmem [resolvable:$true] %s24
      %30 = dma.hbm_to_vmem [thread:$0]  %s1, 4096, %s25, [#allocation3], 64, 64, 4
    $region9: #{tpu_custom_call.1} parent=1 // pred_fallthru
      _
    // Predicated region
    $region10: #{tpu_custom_call.1} parent=1 // pred_check
      _
    $region11: #{tpu_custom_call.1} parent=1 // pred_check_branch
      %32 = sbr.rel (0) target = $region13
    $region12: #{tpu_custom_call.1} parent=1 // pred_region
      %s34 = ssub.s32 1024, 1024
      %35 = vsyncadd [#allocation6], %s34
      %s36 = sshll.u32 [#allocation5], 4
      %s37 = int_to_ptr.vmem [resolvable:$true] %s36
      %42 = dma.hbm_to_vmem [thread:$0]  %s2, 1024, %s37, [#allocation6], 64, 64, 4
    $region13: #{tpu_custom_call.1} parent=1 // pred_fallthru
      _
    // Predicated region
    $region14: #{tpu_custom_call.1} parent=1 // pred_check
      _
    $region15: #{tpu_custom_call.1} parent=1 // pred_check_branch
      %44 = sbr.rel (0) target = $region17
    $region16: #{tpu_custom_call.1} parent=1 // pred_region
      _
    $region17: #{tpu_custom_call.1} parent=1 // pred_fallthru
      _
    // Predicated region
    $region18: #{tpu_custom_call.1} parent=1 // pred_check
      _
    $region19: #{tpu_custom_call.1} parent=1 // pred_check_branch
      %46 = sbr.rel (0) target = $region21
    $region20: #{tpu_custom_call.1} parent=1 // pred_region
      %s48 = ssub.s32 1024, 1024
      %49 = vsyncadd [#allocation6], %s48
      %s50 = sshll.u32 [#allocation7], 4
      %s51 = int_to_ptr.vmem [resolvable:$true] %s50
      %56 = dma.hbm_to_vmem [thread:$0]  %s4, 1024, %s51, [#allocation6], 64, 64, 4
    $region21: #{tpu_custom_call.1} parent=1 // pred_fallthru
      _
    // Predicated region
    $region22: #{tpu_custom_call.1} parent=1 // pred_check
      _
    $region23: #{tpu_custom_call.1} parent=1 // pred_check_branch
      %58 = sbr.rel (0) target = $region25
    $region24: #{tpu_custom_call.1} parent=1 // pred_region
      _
    $region25: #{tpu_custom_call.1} parent=1 // pred_fallthru
      _
    // Predicated region
    $region26: #{tpu_custom_call.1} parent=1 // pred_check
      _
    $region27: #{tpu_custom_call.1} parent=1 // pred_check_branch
      %60 = sbr.rel (0) target = $region29
    $region28: #{tpu_custom_call.1} parent=1 // pred_region
      %s62 = ssub.s32 1024, 1024
      %63 = vsyncadd [#allocation9], %s62
      %s64 = sshll.u32 [#allocation8], 4
      %s65 = int_to_ptr.vmem [resolvable:$true] %s64
      %70 = dma.hbm_to_vmem [thread:$0]  %s6, 1024, %s65, [#allocation9], 64, 64, 4
    $region29: #{tpu_custom_call.1} parent=1 // pred_fallthru
      _
    // Predicated region
    $region30: #{tpu_custom_call.1} parent=1 // pred_check
      _
    $region31: #{tpu_custom_call.1} parent=1 // pred_check_branch
      %72 = sbr.rel (0) target = $region33
    $region32: #{tpu_custom_call.1} parent=1 // pred_region
      _
    $region33: #{tpu_custom_call.1} parent=1 // pred_fallthru
      _
    // Predicated region
    $region34: #{tpu_custom_call.1} parent=1 // pred_check
      _
    $region35: #{tpu_custom_call.1} parent=1 // pred_check_branch
      %74 = sbr.rel (0) target = $region37
    $region36: #{tpu_custom_call.1} parent=1 // pred_region
      %75 = dma.done [#allocation3], 4096
    $region37: #{tpu_custom_call.1} parent=1 // pred_fallthru
      _
    // Predicated region
    $region38: #{tpu_custom_call.1} parent=1 // pred_check
      _
    $region39: #{tpu_custom_call.1} parent=1 // pred_check_branch
      %77 = sbr.rel (0) target = $region41
    $region40: #{tpu_custom_call.1} parent=1 // pred_region
      %78 = dma.done [#allocation6], 1024
    $region41: #{tpu_custom_call.1} parent=1 // pred_fallthru
      _
    // Predicated region
    $region42: #{tpu_custom_call.1} parent=1 // pred_check
      _
    $region43: #{tpu_custom_call.1} parent=1 // pred_check_branch
      %80 = sbr.rel (0) target = $region45
    $region44: #{tpu_custom_call.1} parent=1 // pred_region
      %81 = dma.done [#allocation6], 1024
    $region45: #{tpu_custom_call.1} parent=1 // pred_fallthru
      _
    // Predicated region
    $region46: #{tpu_custom_call.1} parent=1 // pred_check
      _
    $region47: #{tpu_custom_call.1} parent=1 // pred_check_branch
      %83 = sbr.rel (0) target = $region49
    $region48: #{tpu_custom_call.1} parent=1 // pred_region
      %84 = dma.done [#allocation9], 1024
    $region49: #{tpu_custom_call.1} parent=1 // pred_fallthru
      _
    %v86 = vld [vmem:[%s0] sm:$0xff]
    %v87 = vld [vmem:[%s0 + $0x8] sm:$0xff]
    %v88 = vlaneseq
    %v89 = vand.u32 %v88, 127
    %v90 = vadd.s32 %v89, 128
    %v91 = vadd.s32 %v89, 256
    %v92 = vadd.s32 %v89, 384
    %93 = vset.pattern.permute.xlu0 0
    %94 = vperm.xlu0 %93, %v86
    %v95 = vpop.permute.xlu0 %94
    %96 = vset.pattern.permute.xlu0 0
    %97 = vperm.xlu0 %96, %v87
    %v98 = vpop.permute.xlu0 %97
    %vm99 = vcmp.eq.s32.totalorder %v95, %v89
    %vm100 = vcmp.eq.s32.totalorder %v95, %v90
    %vm101 = vcmp.eq.s32.totalorder %v95, %v91
    %vm102 = vcmp.eq.s32.totalorder %v95, %v92
    %vm103 = vcmp.eq.s32.totalorder %v98, %v89
    %vm104 = vcmp.eq.s32.totalorder %v98, %v90
    %vm105 = vcmp.eq.s32.totalorder %v98, %v91
    %vm106 = vcmp.eq.s32.totalorder %v98, %v92
    %v107 = vsel %vm99, 1, 0
    %v108 = vsel %vm100, 1, 0
    %v109 = vsel %vm101, 1, 0
    %v110 = vsel %vm102, 1, 0
    %v111 = vsel %vm103, 1, 0
    %v112 = vsel %vm104, 1, 0
    %v113 = vsel %vm105, 1, 0
    %v114 = vsel %vm106, 1, 0
    %v115 = vcvt.s32.f32 %v107
    %v116 = vcvt.s32.f32 %v108
    %v117 = vcvt.s32.f32 %v109
    %v118 = vcvt.s32.f32 %v110
    %v119 = vcvt.s32.f32 %v111
    %v120 = vcvt.s32.f32 %v112
    %v121 = vcvt.s32.f32 %v113
    %v122 = vcvt.s32.f32 %v114
    %v123 = vadd.f32 %v115, 0.0
    %v124 = vadd.f32 %v116, 0.0
    %v125 = vadd.f32 %v117, 0.0
    %v126 = vadd.f32 %v118, 0.0
    %v127 = vadd.f32 %v119, 0.0
    %v128 = vadd.f32 %v120, 0.0
    %v129 = vadd.f32 %v121, 0.0
    %v130 = vadd.f32 %v122, 0.0
    %131 = vset.pattern.permute.xlu0 1
    %132 = vperm.xlu0 %131, %v86
    %v133 = vpop.permute.xlu0 %132
    %134 = vset.pattern.permute.xlu0 1
    %135 = vperm.xlu0 %134, %v87
    %v136 = vpop.permute.xlu0 %135
    %vm137 = vcmp.eq.s32.totalorder %v133, %v89
    %vm138 = vcmp.eq.s32.totalorder %v133, %v90
    %vm139 = vcmp.eq.s32.totalorder %v133, %v91
    %vm140 = vcmp.eq.s32.totalorder %v133, %v92
    %vm141 = vcmp.eq.s32.totalorder %v136, %v89
    %vm142 = vcmp.eq.s32.totalorder %v136, %v90
    %vm143 = vcmp.eq.s32.totalorder %v136, %v91
    %vm144 = vcmp.eq.s32.totalorder %v136, %v92
    %v145 = vsel %vm137, 1, 0
    %v146 = vsel %vm138, 1, 0
    %v147 = vsel %vm139, 1, 0
    %v148 = vsel %vm140, 1, 0
    %v149 = vsel %vm141, 1, 0
    %v150 = vsel %vm142, 1, 0
    %v151 = vsel %vm143, 1, 0
    %v152 = vsel %vm144, 1, 0
    %v153 = vcvt.s32.f32 %v145
    %v154 = vcvt.s32.f32 %v146
    %v155 = vcvt.s32.f32 %v147
    %v156 = vcvt.s32.f32 %v148
    %v157 = vcvt.s32.f32 %v149
    %v158 = vcvt.s32.f32 %v150
    %v159 = vcvt.s32.f32 %v151
    %v160 = vcvt.s32.f32 %v152
    %v161 = vadd.f32 %v123, %v153
    %v162 = vadd.f32 %v124, %v154
    %v163 = vadd.f32 %v125, %v155
    %v164 = vadd.f32 %v126, %v156
    %v165 = vadd.f32 %v127, %v157
    %v166 = vadd.f32 %v128, %v158
    %v167 = vadd.f32 %v129, %v159
    %v168 = vadd.f32 %v130, %v160
    %169 = vset.pattern.permute.xlu0 2
    %170 = vperm.xlu0 %169, %v86
    %v171 = vpop.permute.xlu0 %170
    %172 = vset.pattern.permute.xlu0 2
    %173 = vperm.xlu0 %172, %v87
    %v174 = vpop.permute.xlu0 %173
    %vm175 = vcmp.eq.s32.totalorder %v171, %v89
    %vm176 = vcmp.eq.s32.totalorder %v171, %v90
    %vm177 = vcmp.eq.s32.totalorder %v171, %v91
    %vm178 = vcmp.eq.s32.totalorder %v171, %v92
    %vm179 = vcmp.eq.s32.totalorder %v174, %v89
    %vm180 = vcmp.eq.s32.totalorder %v174, %v90
    %vm181 = vcmp.eq.s32.totalorder %v174, %v91
    %vm182 = vcmp.eq.s32.totalorder %v174, %v92
    %v183 = vsel %vm175, 1, 0
    %v184 = vsel %vm176, 1, 0
    %v185 = vsel %vm177, 1, 0
    %v186 = vsel %vm178, 1, 0
    %v187 = vsel %vm179, 1, 0
    %v188 = vsel %vm180, 1, 0
    %v189 = vsel %vm181, 1, 0
    %v190 = vsel %vm182, 1, 0
    %v191 = vcvt.s32.f32 %v183
    %v192 = vcvt.s32.f32 %v184
    %v193 = vcvt.s32.f32 %v185
    %v194 = vcvt.s32.f32 %v186
    %v195 = vcvt.s32.f32 %v187
    %v196 = vcvt.s32.f32 %v188
    %v197 = vcvt.s32.f32 %v189
    %v198 = vcvt.s32.f32 %v190
    %v199 = vadd.f32 %v161, %v191
    %v200 = vadd.f32 %v162, %v192
    %v201 = vadd.f32 %v163, %v193
    %v202 = vadd.f32 %v164, %v194
    %v203 = vadd.f32 %v165, %v195
    %v204 = vadd.f32 %v166, %v196
    %v205 = vadd.f32 %v167, %v197
    %v206 = vadd.f32 %v168, %v198
    %207 = vset.pattern.permute.xlu0 3
    %208 = vperm.xlu0 %207, %v86
    %v209 = vpop.permute.xlu0 %208
    %210 = vset.pattern.permute.xlu0 3
    %211 = vperm.xlu0 %210, %v87
    %v212 = vpop.permute.xlu0 %211
    %vm213 = vcmp.eq.s32.totalorder %v209, %v89
    %vm214 = vcmp.eq.s32.totalorder %v209, %v90
    %vm215 = vcmp.eq.s32.totalorder %v209, %v91
    %vm216 = vcmp.eq.s32.totalorder %v209, %v92
    %vm217 = vcmp.eq.s32.totalorder %v212, %v89
    %vm218 = vcmp.eq.s32.totalorder %v212, %v90
    %vm219 = vcmp.eq.s32.totalorder %v212, %v91
    %vm220 = vcmp.eq.s32.totalorder %v212, %v92
    %v221 = vsel %vm213, 1, 0
    %v222 = vsel %vm214, 1, 0
    %v223 = vsel %vm215, 1, 0
    %v224 = vsel %vm216, 1, 0
    %v225 = vsel %vm217, 1, 0
    %v226 = vsel %vm218, 1, 0
    %v227 = vsel %vm219, 1, 0
    %v228 = vsel %vm220, 1, 0
    %v229 = vcvt.s32.f32 %v221
    %v230 = vcvt.s32.f32 %v222
    %v231 = vcvt.s32.f32 %v223
    %v232 = vcvt.s32.f32 %v224
    %v233 = vcvt.s32.f32 %v225
    %v234 = vcvt.s32.f32 %v226
    %v235 = vcvt.s32.f32 %v227
    %v236 = vcvt.s32.f32 %v228
    %v237 = vadd.f32 %v199, %v229
    %v238 = vadd.f32 %v200, %v230
    %v239 = vadd.f32 %v201, %v231
    %v240 = vadd.f32 %v202, %v232
    %v241 = vadd.f32 %v203, %v233
    %v242 = vadd.f32 %v204, %v234
    %v243 = vadd.f32 %v205, %v235
    %v244 = vadd.f32 %v206, %v236
    %245 = vset.pattern.permute.xlu0 4
    %246 = vperm.xlu0 %245, %v86
    %v247 = vpop.permute.xlu0 %246
    %248 = vset.pattern.permute.xlu0 4
    %249 = vperm.xlu0 %248, %v87
    %v250 = vpop.permute.xlu0 %249
    %vm251 = vcmp.eq.s32.totalorder %v247, %v89
    %vm252 = vcmp.eq.s32.totalorder %v247, %v90
    %vm253 = vcmp.eq.s32.totalorder %v247, %v91
    %vm254 = vcmp.eq.s32.totalorder %v247, %v92
    %vm255 = vcmp.eq.s32.totalorder %v250, %v89
    %vm256 = vcmp.eq.s32.totalorder %v250, %v90
    %vm257 = vcmp.eq.s32.totalorder %v250, %v91
    %vm258 = vcmp.eq.s32.totalorder %v250, %v92
    %v259 = vsel %vm251, 1, 0
    %v260 = vsel %vm252, 1, 0
    %v261 = vsel %vm253, 1, 0
    %v262 = vsel %vm254, 1, 0
    %v263 = vsel %vm255, 1, 0
    %v264 = vsel %vm256, 1, 0
    %v265 = vsel %vm257, 1, 0
    %v266 = vsel %vm258, 1, 0
    %v267 = vcvt.s32.f32 %v259
    %v268 = vcvt.s32.f32 %v260
    %v269 = vcvt.s32.f32 %v261
    %v270 = vcvt.s32.f32 %v262
    %v271 = vcvt.s32.f32 %v263
    %v272 = vcvt.s32.f32 %v264
    %v273 = vcvt.s32.f32 %v265
    %v274 = vcvt.s32.f32 %v266
    %v275 = vadd.f32 %v237, %v267
    %v276 = vadd.f32 %v238, %v268
    %v277 = vadd.f32 %v239, %v269
    %v278 = vadd.f32 %v240, %v270
    %v279 = vadd.f32 %v241, %v271
    %v280 = vadd.f32 %v242, %v272
    %v281 = vadd.f32 %v243, %v273
    %v282 = vadd.f32 %v244, %v274
    %283 = vset.pattern.permute.xlu0 5
    %284 = vperm.xlu0 %283, %v86
    %v285 = vpop.permute.xlu0 %284
    %286 = vset.pattern.permute.xlu0 5
    %287 = vperm.xlu0 %286, %v87
    %v288 = vpop.permute.xlu0 %287
    %vm289 = vcmp.eq.s32.totalorder %v285, %v89
    %vm290 = vcmp.eq.s32.totalorder %v285, %v90
    %vm291 = vcmp.eq.s32.totalorder %v285, %v91
    %vm292 = vcmp.eq.s32.totalorder %v285, %v92
    %vm293 = vcmp.eq.s32.totalorder %v288, %v89
    %vm294 = vcmp.eq.s32.totalorder %v288, %v90
    %vm295 = vcmp.eq.s32.totalorder %v288, %v91
    %vm296 = vcmp.eq.s32.totalorder %v288, %v92
    %v297 = vsel %vm289, 1, 0
    %v298 = vsel %vm290, 1, 0
    %v299 = vsel %vm291, 1, 0
    %v300 = vsel %vm292, 1, 0
    %v301 = vsel %vm293, 1, 0
    %v302 = vsel %vm294, 1, 0
    %v303 = vsel %vm295, 1, 0
    %v304 = vsel %vm296, 1, 0
    %v305 = vcvt.s32.f32 %v297
    %v306 = vcvt.s32.f32 %v298
    %v307 = vcvt.s32.f32 %v299
    %v308 = vcvt.s32.f32 %v300
    %v309 = vcvt.s32.f32 %v301
    %v310 = vcvt.s32.f32 %v302
    %v311 = vcvt.s32.f32 %v303
    %v312 = vcvt.s32.f32 %v304
    %v313 = vadd.f32 %v275, %v305
    %v314 = vadd.f32 %v276, %v306
    %v315 = vadd.f32 %v277, %v307
    %v316 = vadd.f32 %v278, %v308
    %v317 = vadd.f32 %v279, %v309
    %v318 = vadd.f32 %v280, %v310
    %v319 = vadd.f32 %v281, %v311
    %v320 = vadd.f32 %v282, %v312
    %321 = vset.pattern.permute.xlu0 6
    %322 = vperm.xlu0 %321, %v86
    %v323 = vpop.permute.xlu0 %322
    %324 = vset.pattern.permute.xlu0 6
    %325 = vperm.xlu0 %324, %v87
    %v326 = vpop.permute.xlu0 %325
    %vm327 = vcmp.eq.s32.totalorder %v323, %v89
    %vm328 = vcmp.eq.s32.totalorder %v323, %v90
    %vm329 = vcmp.eq.s32.totalorder %v323, %v91
    %vm330 = vcmp.eq.s32.totalorder %v323, %v92
    %vm331 = vcmp.eq.s32.totalorder %v326, %v89
    %vm332 = vcmp.eq.s32.totalorder %v326, %v90
    %vm333 = vcmp.eq.s32.totalorder %v326, %v91
    %vm334 = vcmp.eq.s32.totalorder %v326, %v92
    %v335 = vsel %vm327, 1, 0
    %v336 = vsel %vm328, 1, 0
    %v337 = vsel %vm329, 1, 0
    %v338 = vsel %vm330, 1, 0
    %v339 = vsel %vm331, 1, 0
    %v340 = vsel %vm332, 1, 0
    %v341 = vsel %vm333, 1, 0
    %v342 = vsel %vm334, 1, 0
    %v343 = vcvt.s32.f32 %v335
    %v344 = vcvt.s32.f32 %v336
    %v345 = vcvt.s32.f32 %v337
    %v346 = vcvt.s32.f32 %v338
    %v347 = vcvt.s32.f32 %v339
    %v348 = vcvt.s32.f32 %v340
    %v349 = vcvt.s32.f32 %v341
    %v350 = vcvt.s32.f32 %v342
    %v351 = vadd.f32 %v313, %v343
    %v352 = vadd.f32 %v314, %v344
    %v353 = vadd.f32 %v315, %v345
    %v354 = vadd.f32 %v316, %v346
    %v355 = vadd.f32 %v317, %v347
    %v356 = vadd.f32 %v318, %v348
    %v357 = vadd.f32 %v319, %v349
    %v358 = vadd.f32 %v320, %v350
    %359 = vset.pattern.permute.xlu0 7
    %360 = vperm.xlu0 %359, %v86
    %v361 = vpop.permute.xlu0 %360
    %362 = vset.pattern.permute.xlu0 7
    %363 = vperm.xlu0 %362, %v87
    %v364 = vpop.permute.xlu0 %363
    %vm365 = vcmp.eq.s32.totalorder %v361, %v89
    %vm366 = vcmp.eq.s32.totalorder %v361, %v90
    %vm367 = vcmp.eq.s32.totalorder %v361, %v91
    %vm368 = vcmp.eq.s32.totalorder %v361, %v92
    %vm369 = vcmp.eq.s32.totalorder %v364, %v89
    %vm370 = vcmp.eq.s32.totalorder %v364, %v90
    %vm371 = vcmp.eq.s32.totalorder %v364, %v91
    %vm372 = vcmp.eq.s32.totalorder %v364, %v92
    %v373 = vsel %vm365, 1, 0
    %v374 = vsel %vm366, 1, 0
    %v375 = vsel %vm367, 1, 0
    %v376 = vsel %vm368, 1, 0
    %v377 = vsel %vm369, 1, 0
    %v378 = vsel %vm370, 1, 0
    %v379 = vsel %vm371, 1, 0
    %v380 = vsel %vm372, 1, 0
    %v381 = vcvt.s32.f32 %v373
    %v382 = vcvt.s32.f32 %v374
    %v383 = vcvt.s32.f32 %v375
    %v384 = vcvt.s32.f32 %v376
    %v385 = vcvt.s32.f32 %v377
    %v386 = vcvt.s32.f32 %v378
    %v387 = vcvt.s32.f32 %v379
    %v388 = vcvt.s32.f32 %v380
    %v389 = vadd.f32 %v351, %v381
    %v390 = vadd.f32 %v352, %v382
    %v391 = vadd.f32 %v353, %v383
    %v392 = vadd.f32 %v354, %v384
    %v393 = vadd.f32 %v355, %v385
    %v394 = vadd.f32 %v356, %v386
    %v395 = vadd.f32 %v357, %v387
    %v396 = vadd.f32 %v358, %v388
    %v397 = vpack.c.bf16 %v393, %v389
    %v398 = vpack.c.bf16 %v394, %v390
    %v399 = vpack.c.bf16 %v395, %v391
    %v400 = vpack.c.bf16 %v396, %v392
    %v401 = vld [vmem:[#allocation2] sm:$0xf]
    %v402 = vld [vmem:[#allocation2 + $0x4] sm:$0xf]
    %v403 = vld [vmem:[#allocation2 + $0x8] sm:$0xf]
    %v404 = vld [vmem:[#allocation2 + $0xc] sm:$0xf]
    %v405 = vld [vmem:[#allocation2 + $0x10] sm:$0xf]
    %v406 = vld [vmem:[#allocation2 + $0x14] sm:$0xf]
    %v407 = vld [vmem:[#allocation2 + $0x18] sm:$0xf]
    %v408 = vld [vmem:[#allocation2 + $0x1c] sm:$0xf]
    %v409 = vld [vmem:[#allocation2 + $0x20] sm:$0xf]
    %v410 = vld [vmem:[#allocation2 + $0x24] sm:$0xf]
    %v411 = vld [vmem:[#allocation2 + $0x28] sm:$0xf]
    %v412 = vld [vmem:[#allocation2 + $0x2c] sm:$0xf]
    %v413 = vld [vmem:[#allocation2 + $0x30] sm:$0xf]
    %v414 = vld [vmem:[#allocation2 + $0x34] sm:$0xf]
    %v415 = vld [vmem:[#allocation2 + $0x38] sm:$0xf]
    %v416 = vld [vmem:[#allocation2 + $0x3c] sm:$0xf]
    %v417 = vld [vmem:[#allocation2 + $0x40] sm:$0xf]
    %v418 = vld [vmem:[#allocation2 + $0x44] sm:$0xf]
    %v419 = vld [vmem:[#allocation2 + $0x48] sm:$0xf]
    %v420 = vld [vmem:[#allocation2 + $0x4c] sm:$0xf]
    %v421 = vld [vmem:[#allocation2 + $0x50] sm:$0xf]
    %v422 = vld [vmem:[#allocation2 + $0x54] sm:$0xf]
    %v423 = vld [vmem:[#allocation2 + $0x58] sm:$0xf]
    %v424 = vld [vmem:[#allocation2 + $0x5c] sm:$0xf]
    %v425 = vld [vmem:[#allocation2 + $0x60] sm:$0xf]
    %v426 = vld [vmem:[#allocation2 + $0x64] sm:$0xf]
    %v427 = vld [vmem:[#allocation2 + $0x68] sm:$0xf]
    %v428 = vld [vmem:[#allocation2 + $0x6c] sm:$0xf]
    %v429 = vld [vmem:[#allocation2 + $0x70] sm:$0xf]
    %v430 = vld [vmem:[#allocation2 + $0x74] sm:$0xf]
    %v431 = vld [vmem:[#allocation2 + $0x78] sm:$0xf]
    %v432 = vld [vmem:[#allocation2 + $0x7c] sm:$0xf]
    %v433 = vld [vmem:[#allocation2 + $0x80] sm:$0xf]
    %v434 = vld [vmem:[#allocation2 + $0x84] sm:$0xf]
    %v435 = vld [vmem:[#allocation2 + $0x88] sm:$0xf]
    %v436 = vld [vmem:[#allocation2 + $0x8c] sm:$0xf]
    %v437 = vld [vmem:[#allocation2 + $0x90] sm:$0xf]
    %v438 = vld [vmem:[#allocation2 + $0x94] sm:$0xf]
    %v439 = vld [vmem:[#allocation2 + $0x98] sm:$0xf]
    %v440 = vld [vmem:[#allocation2 + $0x9c] sm:$0xf]
    %v441 = vld [vmem:[#allocation2 + $0xa0] sm:$0xf]
    %v442 = vld [vmem:[#allocation2 + $0xa4] sm:$0xf]
    %v443 = vld [vmem:[#allocation2 + $0xa8] sm:$0xf]
    %v444 = vld [vmem:[#allocation2 + $0xac] sm:$0xf]
    %v445 = vld [vmem:[#allocation2 + $0xb0] sm:$0xf]
    %v446 = vld [vmem:[#allocation2 + $0xb4] sm:$0xf]
    %v447 = vld [vmem:[#allocation2 + $0xb8] sm:$0xf]
    %v448 = vld [vmem:[#allocation2 + $0xbc] sm:$0xf]
    %v449 = vld [vmem:[#allocation2 + $0xc0] sm:$0xf]
    %v450 = vld [vmem:[#allocation2 + $0xc4] sm:$0xf]
    %v451 = vld [vmem:[#allocation2 + $0xc8] sm:$0xf]
    %v452 = vld [vmem:[#allocation2 + $0xcc] sm:$0xf]
    %v453 = vld [vmem:[#allocation2 + $0xd0] sm:$0xf]
    %v454 = vld [vmem:[#allocation2 + $0xd4] sm:$0xf]
    %v455 = vld [vmem:[#allocation2 + $0xd8] sm:$0xf]
    %v456 = vld [vmem:[#allocation2 + $0xdc] sm:$0xf]
    %v457 = vld [vmem:[#allocation2 + $0xe0] sm:$0xf]
    %v458 = vld [vmem:[#allocation2 + $0xe4] sm:$0xf]
    %v459 = vld [vmem:[#allocation2 + $0xe8] sm:$0xf]
    %v460 = vld [vmem:[#allocation2 + $0xec] sm:$0xf]
    %v461 = vld [vmem:[#allocation2 + $0xf0] sm:$0xf]
    %v462 = vld [vmem:[#allocation2 + $0xf4] sm:$0xf]
    %v463 = vld [vmem:[#allocation2 + $0xf8] sm:$0xf]
    %v464 = vld [vmem:[#allocation2 + $0xfc] sm:$0xf]
    %v529 = vunpack.c.l.b16 %v401
    %v530 = vunpack.c.l.b16 %v402
    %v531 = vunpack.c.l.b16 %v403
    %v532 = vunpack.c.l.b16 %v404
    %v533 = vunpack.c.l.b16 %v405
    %v534 = vunpack.c.l.b16 %v406
    %v535 = vunpack.c.l.b16 %v407
    %v536 = vunpack.c.l.b16 %v408
    %v537 = vunpack.c.l.b16 %v409
    %v538 = vunpack.c.l.b16 %v410
    %v539 = vunpack.c.l.b16 %v411
    %v540 = vunpack.c.l.b16 %v412
    %v541 = vunpack.c.l.b16 %v413
    %v542 = vunpack.c.l.b16 %v414
    %v543 = vunpack.c.l.b16 %v415
    %v544 = vunpack.c.l.b16 %v416
    %v545 = vunpack.c.l.b16 %v417
    %v546 = vunpack.c.l.b16 %v418
    %v547 = vunpack.c.l.b16 %v419
    %v548 = vunpack.c.l.b16 %v420
    %v549 = vunpack.c.l.b16 %v421
    %v550 = vunpack.c.l.b16 %v422
    %v551 = vunpack.c.l.b16 %v423
    %v552 = vunpack.c.l.b16 %v424
    %v553 = vunpack.c.l.b16 %v425
    %v554 = vunpack.c.l.b16 %v426
    %v555 = vunpack.c.l.b16 %v427
    %v556 = vunpack.c.l.b16 %v428
    %v557 = vunpack.c.l.b16 %v429
    %v558 = vunpack.c.l.b16 %v430
    %v559 = vunpack.c.l.b16 %v431
    %v560 = vunpack.c.l.b16 %v432
    %v561 = vunpack.c.l.b16 %v433
    %v562 = vunpack.c.l.b16 %v434
    %v563 = vunpack.c.l.b16 %v435
    %v564 = vunpack.c.l.b16 %v436
    %v565 = vunpack.c.l.b16 %v437
    %v566 = vunpack.c.l.b16 %v438
    %v567 = vunpack.c.l.b16 %v439
    %v568 = vunpack.c.l.b16 %v440
    %v569 = vunpack.c.l.b16 %v441
    %v570 = vunpack.c.l.b16 %v442
    %v571 = vunpack.c.l.b16 %v443
    %v572 = vunpack.c.l.b16 %v444
    %v573 = vunpack.c.l.b16 %v445
    %v574 = vunpack.c.l.b16 %v446
    %v575 = vunpack.c.l.b16 %v447
    %v576 = vunpack.c.l.b16 %v448
    %v577 = vunpack.c.l.b16 %v449
    %v578 = vunpack.c.l.b16 %v450
    %v579 = vunpack.c.l.b16 %v451
    %v580 = vunpack.c.l.b16 %v452
    %v581 = vunpack.c.l.b16 %v453
    %v582 = vunpack.c.l.b16 %v454
    %v583 = vunpack.c.l.b16 %v455
    %v584 = vunpack.c.l.b16 %v456
    %v585 = vunpack.c.l.b16 %v457
    %v586 = vunpack.c.l.b16 %v458
    %v587 = vunpack.c.l.b16 %v459
    %v588 = vunpack.c.l.b16 %v460
    %v589 = vunpack.c.l.b16 %v461
    %v590 = vunpack.c.l.b16 %v462
    %v591 = vunpack.c.l.b16 %v463
    %v592 = vunpack.c.l.b16 %v464
    %v593 = vpack.c.b16 %v530, %v529
    %v594 = vpack.c.b16 %v532, %v531
    %v595 = vpack.c.b16 %v534, %v533
    %v596 = vpack.c.b16 %v536, %v535
    %v597 = vpack.c.b16 %v538, %v537
    %v598 = vpack.c.b16 %v540, %v539
    %v599 = vpack.c.b16 %v542, %v541
    %v600 = vpack.c.b16 %v544, %v543
    %v601 = vpack.c.b16 %v546, %v545
    %v602 = vpack.c.b16 %v548, %v547
    %v603 = vpack.c.b16 %v550, %v549
    %v604 = vpack.c.b16 %v552, %v551
    %v605 = vpack.c.b16 %v554, %v553
    %v606 = vpack.c.b16 %v556, %v555
    %v607 = vpack.c.b16 %v558, %v557
    %v608 = vpack.c.b16 %v560, %v559
    %v609 = vpack.c.b16 %v562, %v561
    %v610 = vpack.c.b16 %v564, %v563
    %v611 = vpack.c.b16 %v566, %v565
    %v612 = vpack.c.b16 %v568, %v567
    %v613 = vpack.c.b16 %v570, %v569
    %v614 = vpack.c.b16 %v572, %v571
    %v615 = vpack.c.b16 %v574, %v573
    %v616 = vpack.c.b16 %v576, %v575
    %v617 = vpack.c.b16 %v578, %v577
    %v618 = vpack.c.b16 %v580, %v579
    %v619 = vpack.c.b16 %v582, %v581
    %v620 = vpack.c.b16 %v584, %v583
    %v621 = vpack.c.b16 %v586, %v585
    %v622 = vpack.c.b16 %v588, %v587
    %v623 = vpack.c.b16 %v590, %v589
    %v624 = vpack.c.b16 %v592, %v591
    %657 = vmatprep.subr.bf16.mxu0 0
    %658 = vmatpush1.bf16.msra.mxu0 %v600
    %659 = vmatprep.subr.bf16.mxu0 0
    %660 = vmatpush1.bf16.msra.mxu0 %v599
    %661 = vmatprep.subr.bf16.mxu0 0
    %662 = vmatpush1.bf16.msra.mxu0 %v598
    %663 = vmatprep.subr.bf16.mxu0 0
    %664 = vmatpush1.bf16.msra.mxu0 %v597
    %665 = vmatprep.subr.bf16.mxu0 0
    %666 = vmatpush1.bf16.msra.mxu0 %v596
    %667 = vmatprep.subr.bf16.mxu0 0
    %668 = vmatpush1.bf16.msra.mxu0 %v595
    %669 = vmatprep.subr.bf16.mxu0 0
    %670 = vmatpush1.bf16.msra.mxu0 %v594
    %671 = vmatprep.subr.bf16.mxu0 0
    %672 = vmatpush1.bf16.msra.mxu0 %v593
    %673 = vmatprep.subr.bf16.mxu0 0
    %674 = vmatpush2.bf16.msra.mxu0 %v608
    %675 = vmatprep.subr.bf16.mxu0 0
    %676 = vmatpush2.bf16.msra.mxu0 %v607
    %677 = vmatprep.subr.bf16.mxu0 0
    %678 = vmatpush2.bf16.msra.mxu0 %v606
    %679 = vmatprep.subr.bf16.mxu0 0
    %680 = vmatpush2.bf16.msra.mxu0 %v605
    %681 = vmatprep.subr.bf16.mxu0 0
    %682 = vmatpush2.bf16.msra.mxu0 %v604
    %683 = vmatprep.subr.bf16.mxu0 0
    %684 = vmatpush2.bf16.msra.mxu0 %v603
    %685 = vmatprep.subr.bf16.mxu0 0
    %686 = vmatpush2.bf16.msra.mxu0 %v602
    %687 = vmatprep.subr.bf16.mxu0 0
    %688 = vmatpush2.bf16.msra.mxu0 %v601
    %689 = vmatprep.mubr.bf16.mxu0 %v398
    %690 = vmatmul.mubr.bf16.gmra.mxu0 %v397
    %v691 = vpop.f32.mrf.mxu0
    %v692 = vadd.f32 0.0, %v691
    %v693 = vpop.f32.mrf.mxu0
    %v694 = vpop.f32.mrf.mxu0
    %v695 = vadd.f32 0.0, %v694
    %v696 = vpop.f32.mrf.mxu0
    %697 = vdwg.mxu0
    %698 = vmatprep.subr.bf16.mxu0 0
    %699 = vmatpush1.bf16.msra.mxu0 %v616
    %700 = vmatprep.subr.bf16.mxu0 0
    %701 = vmatpush1.bf16.msra.mxu0 %v615
    %702 = vmatprep.subr.bf16.mxu0 0
    %703 = vmatpush1.bf16.msra.mxu0 %v614
    %704 = vmatprep.subr.bf16.mxu0 0
    %705 = vmatpush1.bf16.msra.mxu0 %v613
    %706 = vmatprep.subr.bf16.mxu0 0
    %707 = vmatpush1.bf16.msra.mxu0 %v612
    %708 = vmatprep.subr.bf16.mxu0 0
    %709 = vmatpush1.bf16.msra.mxu0 %v611
    %710 = vmatprep.subr.bf16.mxu0 0
    %711 = vmatpush1.bf16.msra.mxu0 %v610
    %712 = vmatprep.subr.bf16.mxu0 0
    %713 = vmatpush1.bf16.msra.mxu0 %v609
    %714 = vmatprep.subr.bf16.mxu0 0
    %715 = vmatpush2.bf16.msra.mxu0 %v624
    %716 = vmatprep.subr.bf16.mxu0 0
    %717 = vmatpush2.bf16.msra.mxu0 %v623
    %718 = vmatprep.subr.bf16.mxu0 0
    %719 = vmatpush2.bf16.msra.mxu0 %v622
    %720 = vmatprep.subr.bf16.mxu0 0
    %721 = vmatpush2.bf16.msra.mxu0 %v621
    %722 = vmatprep.subr.bf16.mxu0 0
    %723 = vmatpush2.bf16.msra.mxu0 %v620
    %724 = vmatprep.subr.bf16.mxu0 0
    %725 = vmatpush2.bf16.msra.mxu0 %v619
    %726 = vmatprep.subr.bf16.mxu0 0
    %727 = vmatpush2.bf16.msra.mxu0 %v618
    %728 = vmatprep.subr.bf16.mxu0 0
    %729 = vmatpush2.bf16.msra.mxu0 %v617
    %730 = vmatprep.mubr.bf16.mxu0 %v400
    %731 = vmatmul.mubr.bf16.gmra.mxu0 %v399
    %v732 = vpop.f32.mrf.mxu0
    %v733 = vadd.f32 %v692, %v732
    %v734 = vpop.f32.mrf.mxu0
    %v735 = vpop.f32.mrf.mxu0
    %v736 = vadd.f32 %v695, %v735
    %v737 = vpop.f32.mrf.mxu0
    %738 = vdwg.mxu0
    %v739 = vmul.f32 %v733, 0.125
    %v740 = vmul.f32 %v736, 0.125
    %v741 = vpack.c.bf16 %v740, %v739
    %v742 = vld [vmem:[#allocation5] sm:$0xf]
    %v743 = vld [vmem:[#allocation5 + $0x4] sm:$0xf]
    %v744 = vld [vmem:[#allocation5 + $0x8] sm:$0xf]
    %v745 = vld [vmem:[#allocation5 + $0xc] sm:$0xf]
    %v746 = vld [vmem:[#allocation5 + $0x10] sm:$0xf]
    %v747 = vld [vmem:[#allocation5 + $0x14] sm:$0xf]
    %v748 = vld [vmem:[#allocation5 + $0x18] sm:$0xf]
    %v749 = vld [vmem:[#allocation5 + $0x1c] sm:$0xf]
    %v750 = vld [vmem:[#allocation5 + $0x20] sm:$0xf]
    %v751 = vld [vmem:[#allocation5 + $0x24] sm:$0xf]
    %v752 = vld [vmem:[#allocation5 + $0x28] sm:$0xf]
    %v753 = vld [vmem:[#allocation5 + $0x2c] sm:$0xf]
    %v754 = vld [vmem:[#allocation5 + $0x30] sm:$0xf]
    %v755 = vld [vmem:[#allocation5 + $0x34] sm:$0xf]
    %v756 = vld [vmem:[#allocation5 + $0x38] sm:$0xf]
    %v757 = vld [vmem:[#allocation5 + $0x3c] sm:$0xf]
    %v758 = vld [vmem:[%s3] sm:$0x1]
    %v760 = vlaneseq
    %v761 = vshrl.u32 %v760, 7
    %v762 = vsub.s32 0, %v761
    %v763 = vrot.slane %v758, %v762
    %v781 = vunpack.c.l.b16 %v742
    %v782 = vunpack.c.l.b16 %v743
    %v783 = vunpack.c.l.b16 %v744
    %v784 = vunpack.c.l.b16 %v745
    %v785 = vunpack.c.l.b16 %v746
    %v786 = vunpack.c.l.b16 %v747
    %v787 = vunpack.c.l.b16 %v748
    %v788 = vunpack.c.l.b16 %v749
    %v789 = vunpack.c.l.b16 %v750
    %v790 = vunpack.c.l.b16 %v751
    %v791 = vunpack.c.l.b16 %v752
    %v792 = vunpack.c.l.b16 %v753
    %v793 = vunpack.c.l.b16 %v754
    %v794 = vunpack.c.l.b16 %v755
    %v795 = vunpack.c.l.b16 %v756
    %v796 = vunpack.c.l.b16 %v757
    %v797 = vpack.c.b16 %v782, %v781
    %v798 = vpack.c.b16 %v784, %v783
    %v799 = vpack.c.b16 %v786, %v785
    %v800 = vpack.c.b16 %v788, %v787
    %v801 = vpack.c.b16 %v790, %v789
    %v802 = vpack.c.b16 %v792, %v791
    %v803 = vpack.c.b16 %v794, %v793
    %v804 = vpack.c.b16 %v796, %v795
    %813 = vmatprep.subr.bf16.mxu0 0
    %814 = vmatpush1.bf16.msra.mxu0 %v804
    %815 = vmatprep.subr.bf16.mxu0 0
    %816 = vmatpush1.bf16.msra.mxu0 %v803
    %817 = vmatprep.subr.bf16.mxu0 0
    %818 = vmatpush1.bf16.msra.mxu0 %v802
    %819 = vmatprep.subr.bf16.mxu0 0
    %820 = vmatpush1.bf16.msra.mxu0 %v801
    %821 = vmatprep.subr.bf16.mxu0 0
    %822 = vmatpush1.bf16.msra.mxu0 %v800
    %823 = vmatprep.subr.bf16.mxu0 0
    %824 = vmatpush1.bf16.msra.mxu0 %v799
    %825 = vmatprep.subr.bf16.mxu0 0
    %826 = vmatpush1.bf16.msra.mxu0 %v798
    %827 = vmatprep.subr.bf16.mxu0 0
    %828 = vmatpush1.bf16.msra.mxu0 %v797
    %829 = vmatprep.subr.bf16.mxu0 0
    %830 = vmatpush2.bf16.msra.mxu0 0
    %831 = vmatprep.subr.bf16.mxu0 0
    %832 = vmatpush2.bf16.msra.mxu0 0
    %833 = vmatprep.subr.bf16.mxu0 0
    %834 = vmatpush2.bf16.msra.mxu0 0
    %835 = vmatprep.subr.bf16.mxu0 0
    %836 = vmatpush2.bf16.msra.mxu0 0
    %837 = vmatprep.subr.bf16.mxu0 0
    %838 = vmatpush2.bf16.msra.mxu0 0
    %839 = vmatprep.subr.bf16.mxu0 0
    %840 = vmatpush2.bf16.msra.mxu0 0
    %841 = vmatprep.subr.bf16.mxu0 0
    %842 = vmatpush2.bf16.msra.mxu0 0
    %843 = vmatprep.subr.bf16.mxu0 0
    %844 = vmatpush2.bf16.msra.mxu0 0
    %845 = vmatprep.mubr.bf16.mxu0 0
    %846 = vmatmul.mubr.bf16.gmra.mxu0 %v741
    %v847 = vpop.f32.mrf.mxu0
    %v848 = vadd.f32 %v763, %v847
    %v849 = vpop.f32.mrf.mxu0
    %v850 = vpop.f32.mrf.mxu0
    %v851 = vadd.f32 %v763, %v850
    %v852 = vpop.f32.mrf.mxu0
    %853 = vdwg.mxu0
    %v854 = vmax.f32 %v848, 0.0
    %v855 = vmax.f32 %v851, 0.0
    %v856 = vpack.c.bf16 %v855, %v854
    %v857 = vld [vmem:[#allocation7] sm:$0xf]
    %v858 = vld [vmem:[#allocation7 + $0x4] sm:$0xf]
    %v859 = vld [vmem:[#allocation7 + $0x8] sm:$0xf]
    %v860 = vld [vmem:[#allocation7 + $0xc] sm:$0xf]
    %v861 = vld [vmem:[#allocation7 + $0x10] sm:$0xf]
    %v862 = vld [vmem:[#allocation7 + $0x14] sm:$0xf]
    %v863 = vld [vmem:[#allocation7 + $0x18] sm:$0xf]
    %v864 = vld [vmem:[#allocation7 + $0x1c] sm:$0xf]
    %v865 = vld [vmem:[#allocation7 + $0x20] sm:$0xf]
    %v866 = vld [vmem:[#allocation7 + $0x24] sm:$0xf]
    %v867 = vld [vmem:[#allocation7 + $0x28] sm:$0xf]
    %v868 = vld [vmem:[#allocation7 + $0x2c] sm:$0xf]
    %v869 = vld [vmem:[#allocation7 + $0x30] sm:$0xf]
    %v870 = vld [vmem:[#allocation7 + $0x34] sm:$0xf]
    %v871 = vld [vmem:[#allocation7 + $0x38] sm:$0xf]
    %v872 = vld [vmem:[#allocation7 + $0x3c] sm:$0xf]
    %v873 = vld [vmem:[%s5] sm:$0x1]
    %v875 = vlaneseq
    %v876 = vshrl.u32 %v875, 7
    %v877 = vsub.s32 0, %v876
    %v878 = vrot.slane %v873, %v877
    %v896 = vunpack.c.l.b16 %v857
    %v897 = vunpack.c.l.b16 %v858
    %v898 = vunpack.c.l.b16 %v859
    %v899 = vunpack.c.l.b16 %v860
    %v900 = vunpack.c.l.b16 %v861
    %v901 = vunpack.c.l.b16 %v862
    %v902 = vunpack.c.l.b16 %v863
    %v903 = vunpack.c.l.b16 %v864
    %v904 = vunpack.c.l.b16 %v865
    %v905 = vunpack.c.l.b16 %v866
    %v906 = vunpack.c.l.b16 %v867
    %v907 = vunpack.c.l.b16 %v868
    %v908 = vunpack.c.l.b16 %v869
    %v909 = vunpack.c.l.b16 %v870
    %v910 = vunpack.c.l.b16 %v871
    %v911 = vunpack.c.l.b16 %v872
    %v912 = vpack.c.b16 %v897, %v896
    %v913 = vpack.c.b16 %v899, %v898
    %v914 = vpack.c.b16 %v901, %v900
    %v915 = vpack.c.b16 %v903, %v902
    %v916 = vpack.c.b16 %v905, %v904
    %v917 = vpack.c.b16 %v907, %v906
    %v918 = vpack.c.b16 %v909, %v908
    %v919 = vpack.c.b16 %v911, %v910
    %928 = vmatprep.subr.bf16.mxu0 0
    %929 = vmatpush1.bf16.msra.mxu0 %v919
    %930 = vmatprep.subr.bf16.mxu0 0
    %931 = vmatpush1.bf16.msra.mxu0 %v918
    %932 = vmatprep.subr.bf16.mxu0 0
    %933 = vmatpush1.bf16.msra.mxu0 %v917
    %934 = vmatprep.subr.bf16.mxu0 0
    %935 = vmatpush1.bf16.msra.mxu0 %v916
    %936 = vmatprep.subr.bf16.mxu0 0
    %937 = vmatpush1.bf16.msra.mxu0 %v915
    %938 = vmatprep.subr.bf16.mxu0 0
    %939 = vmatpush1.bf16.msra.mxu0 %v914
    %940 = vmatprep.subr.bf16.mxu0 0
    %941 = vmatpush1.bf16.msra.mxu0 %v913
    %942 = vmatprep.subr.bf16.mxu0 0
    %943 = vmatpush1.bf16.msra.mxu0 %v912
    %944 = vmatprep.subr.bf16.mxu0 0
    %945 = vmatpush2.bf16.msra.mxu0 0
    %946 = vmatprep.subr.bf16.mxu0 0
    %947 = vmatpush2.bf16.msra.mxu0 0
    %948 = vmatprep.subr.bf16.mxu0 0
    %949 = vmatpush2.bf16.msra.mxu0 0
    %950 = vmatprep.subr.bf16.mxu0 0
    %951 = vmatpush2.bf16.msra.mxu0 0
    %952 = vmatprep.subr.bf16.mxu0 0
    %953 = vmatpush2.bf16.msra.mxu0 0
    %954 = vmatprep.subr.bf16.mxu0 0
    %955 = vmatpush2.bf16.msra.mxu0 0
    %956 = vmatprep.subr.bf16.mxu0 0
    %957 = vmatpush2.bf16.msra.mxu0 0
    %958 = vmatprep.subr.bf16.mxu0 0
    %959 = vmatpush2.bf16.msra.mxu0 0
    %960 = vmatprep.mubr.bf16.mxu0 0
    %961 = vmatmul.mubr.bf16.gmra.mxu0 %v856
    %v962 = vpop.f32.mrf.mxu0
    %v963 = vadd.f32 %v878, %v962
    %v964 = vpop.f32.mrf.mxu0
    %v965 = vpop.f32.mrf.mxu0
    %v966 = vadd.f32 %v878, %v965
    %v967 = vpop.f32.mrf.mxu0
    %968 = vdwg.mxu0
    %v969 = vmax.f32 %v963, 0.0
    %v970 = vmax.f32 %v966, 0.0
    %v971 = vpack.c.bf16 %v970, %v969
    %v972 = vld [vmem:[#allocation8] sm:$0xf]
    %v973 = vld [vmem:[#allocation8 + $0x4] sm:$0xf]
    %v974 = vld [vmem:[#allocation8 + $0x8] sm:$0xf]
    %v975 = vld [vmem:[#allocation8 + $0xc] sm:$0xf]
    %v976 = vld [vmem:[#allocation8 + $0x10] sm:$0xf]
    %v977 = vld [vmem:[#allocation8 + $0x14] sm:$0xf]
    %v978 = vld [vmem:[#allocation8 + $0x18] sm:$0xf]
    %v979 = vld [vmem:[#allocation8 + $0x1c] sm:$0xf]
    %v980 = vld [vmem:[#allocation8 + $0x20] sm:$0xf]
    %v981 = vld [vmem:[#allocation8 + $0x24] sm:$0xf]
    %v982 = vld [vmem:[#allocation8 + $0x28] sm:$0xf]
    %v983 = vld [vmem:[#allocation8 + $0x2c] sm:$0xf]
    %v984 = vld [vmem:[#allocation8 + $0x30] sm:$0xf]
    %v985 = vld [vmem:[#allocation8 + $0x34] sm:$0xf]
    %v986 = vld [vmem:[#allocation8 + $0x38] sm:$0xf]
    %v987 = vld [vmem:[#allocation8 + $0x3c] sm:$0xf]
    %v988 = vld [vmem:[%s7] sm:$0x1]
    %v990 = vlaneseq
    %v991 = vshrl.u32 %v990, 7
    %v992 = vsub.s32 0, %v991
    %v993 = vrot.slane %v988, %v992
    %v1011 = vunpack.c.l.b16 %v972
    %v1012 = vunpack.c.l.b16 %v973
    %v1013 = vunpack.c.l.b16 %v974
    %v1014 = vunpack.c.l.b16 %v975
    %v1015 = vunpack.c.l.b16 %v976
    %v1016 = vunpack.c.l.b16 %v977
    %v1017 = vunpack.c.l.b16 %v978
    %v1018 = vunpack.c.l.b16 %v979
    %v1019 = vunpack.c.l.b16 %v980
    %v1020 = vunpack.c.l.b16 %v981
    %v1021 = vunpack.c.l.b16 %v982
    %v1022 = vunpack.c.l.b16 %v983
    %v1023 = vunpack.c.l.b16 %v984
    %v1024 = vunpack.c.l.b16 %v985
    %v1025 = vunpack.c.l.b16 %v986
    %v1026 = vunpack.c.l.b16 %v987
    %v1027 = vpack.c.b16 %v1012, %v1011
    %v1028 = vpack.c.b16 %v1014, %v1013
    %v1029 = vpack.c.b16 %v1016, %v1015
    %v1030 = vpack.c.b16 %v1018, %v1017
    %v1031 = vpack.c.b16 %v1020, %v1019
    %v1032 = vpack.c.b16 %v1022, %v1021
    %v1033 = vpack.c.b16 %v1024, %v1023
    %v1034 = vpack.c.b16 %v1026, %v1025
    %1043 = vmatprep.subr.bf16.mxu0 0
    %1044 = vmatpush1.bf16.msra.mxu0 %v1034
    %1045 = vmatprep.subr.bf16.mxu0 0
    %1046 = vmatpush1.bf16.msra.mxu0 %v1033
    %1047 = vmatprep.subr.bf16.mxu0 0
    %1048 = vmatpush1.bf16.msra.mxu0 %v1032
    %1049 = vmatprep.subr.bf16.mxu0 0
    %1050 = vmatpush1.bf16.msra.mxu0 %v1031
    %1051 = vmatprep.subr.bf16.mxu0 0
    %1052 = vmatpush1.bf16.msra.mxu0 %v1030
    %1053 = vmatprep.subr.bf16.mxu0 0
    %1054 = vmatpush1.bf16.msra.mxu0 %v1029
    %1055 = vmatprep.subr.bf16.mxu0 0
    %1056 = vmatpush1.bf16.msra.mxu0 %v1028
    %1057 = vmatprep.subr.bf16.mxu0 0
    %1058 = vmatpush1.bf16.msra.mxu0 %v1027
    %1059 = vmatprep.subr.bf16.mxu0 0
    %1060 = vmatpush2.bf16.msra.mxu0 0
    %1061 = vmatprep.subr.bf16.mxu0 0
    %1062 = vmatpush2.bf16.msra.mxu0 0
    %1063 = vmatprep.subr.bf16.mxu0 0
    %1064 = vmatpush2.bf16.msra.mxu0 0
    %1065 = vmatprep.subr.bf16.mxu0 0
    %1066 = vmatpush2.bf16.msra.mxu0 0
    %1067 = vmatprep.subr.bf16.mxu0 0
    %1068 = vmatpush2.bf16.msra.mxu0 0
    %1069 = vmatprep.subr.bf16.mxu0 0
    %1070 = vmatpush2.bf16.msra.mxu0 0
    %1071 = vmatprep.subr.bf16.mxu0 0
    %1072 = vmatpush2.bf16.msra.mxu0 0
    %1073 = vmatprep.subr.bf16.mxu0 0
    %1074 = vmatpush2.bf16.msra.mxu0 0
    %1075 = vmatprep.mubr.bf16.mxu0 0
    %1076 = vmatmul.mubr.bf16.gmra.mxu0 %v971
    %v1077 = vpop.f32.mrf.mxu0
    %v1078 = vadd.f32 %v993, %v1077
    %v1079 = vpop.f32.mrf.mxu0
    %v1080 = vpop.f32.mrf.mxu0
    %v1081 = vadd.f32 %v993, %v1080
    %v1082 = vpop.f32.mrf.mxu0
    %1083 = vdwg.mxu0
    %v1084 = vmul.f32 %v1078, %v1078
    %v1085 = vmul.f32 %v1081, %v1081
    %1086 = vadd.xlane.f32.xlu0 %v1084
    %v1087 = vpop.xlane.xlu0 %1086
    %1088 = vadd.xlane.f32.xlu0 %v1085
    %v1089 = vpop.xlane.xlu0 %1088
    %v1090 = vmax.f32 %v1087, 1e-24
    %v1091 = vmax.f32 %v1089, 1e-24
    %v1092 = vrsqrt.pop %v1090
    %v1093 = vrsqrt.pop %v1091
    %v1094 = vmul.f32 %v1078, %v1092
    %v1095 = vmul.f32 %v1081, %v1093
    %1096 = vst [vmem:[#allocation10] sm:$0xff] %v1094
    %1097 = vst [vmem:[#allocation10 + $0x8] sm:$0xff] %v1095
    // Predicated region
    $region50: #{tpu_custom_call.1} parent=1 // pred_check
      _
    $region51: #{tpu_custom_call.1} parent=1 // pred_check_branch
      %1099 = sbr.rel (0) target = $region53
    $region52: #{tpu_custom_call.1} parent=1 // pred_region
      %s1101 = ssub.s32 256, 256
      %1102 = vsyncadd [#allocation4], %s1101
      %s1103 = sshll.u32 [#allocation10], 4
      %s1104 = int_to_ptr.vmem [resolvable:$true] %s1103
      %1109 = dma.vmem_to_hbm [thread:$0]  %s1104, 256, %s8, [#allocation4], 128, 128, 8
    $region53: #{tpu_custom_call.1} parent=1 // pred_fallthru
      _
    // Predicated region
    $region54: #{tpu_custom_call.1} parent=1 // pred_check
      _
    $region55: #{tpu_custom_call.1} parent=1 // pred_check_branch
      %1111 = sbr.rel (0) target = $region57
    $region56: #{tpu_custom_call.1} parent=1 // pred_region
      %1112 = dma.done [#allocation4], 256
    $region57: #{tpu_custom_call.1} parent=1 // pred_fallthru
      _
    %1113 = vsyncpa [#allocation3], 1
    %1114 = vsyncpa [#allocation6], 1
    %1115 = vsyncpa [#allocation9], 1
    %1116 = vsyncpa [#allocation4], 1

</llo_original>
